<compile_context>
chip_gen: v5e
topology: v5e:2x2
jax: 0.10.0
libtpu: 0.0.40
codegen_flags: <defaults>
</compile_context>

<pallas_src>
import functools

import jax
import jax.numpy as jnp
from jax.experimental import pallas as pl
from jax.experimental.pallas import tpu as pltpu


def _round_up(a, m):
    return ((a + m - 1) // m) * m


def ffn_kernel(x_ref, w1_ref, b1_ref, w2_ref, b2_ref, gamma_ref, beta_ref,
               o_ref, acc_ref, *, d_real, eps):
    # x_ref: (tm, Dp) f32, w1_ref: (Dp, tf) bf16, b1_ref: (1, tf) f32,
    # w2_ref: (tf, Dp) bf16, b2_ref/gamma_ref/beta_ref: (1, Dp) f32,
    # o_ref: (tm, Dp), acc_ref: (tm, Dp) f32 scratch.
    f = pl.program_id(1)
    nf = pl.num_programs(1)

    @pl.when(f == 0)
    def _():
        acc_ref[...] = jnp.zeros_like(acc_ref)

    # Linear1 + ReLU on this F-slice (bf16 operands, f32 MXU accumulation).
    x_bf = x_ref[...].astype(jnp.bfloat16)
    h = jnp.dot(x_bf, w1_ref[...], preferred_element_type=jnp.float32) + b1_ref[...]
    h = jnp.maximum(h, 0.0)

    # Linear2 partial product accumulated over the F axis.
    acc_ref[...] += jnp.dot(h.astype(jnp.bfloat16), w2_ref[...],
                            preferred_element_type=jnp.float32)

    @pl.when(f == nf - 1)
    def _():
        # Dropout: eval-mode -> identity.
        # TODO(synk): training-mode dropout (pltpu.prng_seed + pltpu.prng_random_bits) not implemented.
        x = x_ref[...].astype(jnp.float32)
        y = acc_ref[...] + b2_ref[...]
        z = x + y  # residual, f32

        d_pad = z.shape[-1]
        inv_d = 1.0 / d_real
        # mean over the REAL D columns (padded columns of z are exactly zero).
        mean = jnp.sum(z, axis=-1, keepdims=True) * inv_d
        if d_real != d_pad:
            lane = jax.lax.broadcasted_iota(jnp.int32, z.shape, dimension=1)
            diff = jnp.where(lane < d_real, z - mean, 0.0)
        else:
            diff = z - mean
        var = jnp.sum(diff * diff, axis=-1, keepdims=True) * inv_d
        z_hat = (z - mean) * jax.lax.rsqrt(var + eps)
        # gamma/beta are zero in padded columns -> padded output columns are 0 (sliced off anyway).
        o_ref[...] = (z_hat * gamma_ref[...] + beta_ref[...]).astype(o_ref.dtype)


def feed_forward(x, w1, b1, w2, b2, gamma, beta, *,
                 tm_target=256, tf_target=512, eps=1e-6):
    """x: (B, S, D) float32. w1: (D, F), w2: (F, D). Returns (B, S, D) float32."""
    B, S, D = x.shape
    F = w1.shape[1]
    T = B * S

    # Lane-dense padding (multiples of 128 on the last dims).
    D_pad = _round_up(D, 128)
    F_pad = _round_up(F, 128)

    # Row tile: as large as possible up to tm_target, multiple of 8 sublanes.
    tm = min(tm_target, _round_up(T, 8))
    tm = max(8, (tm // 8) * 8)
    T_pad = _round_up(T, tm)

    # F tile: largest multiple of 128 <= tf_target that divides F_pad.
    tf = min(tf_target, F_pad)
    while F_pad % tf != 0:
        tf -= 128
    nF = F_pad // tf
    nT = T_pad // tm

    # ---- pad & lay out operands (weights in bf16 to halve HBM traffic) ----
    x2d = jnp.pad(x.reshape(T, D), ((0, T_pad - T), (0, D_pad - D)))
    w1p = jnp.pad(w1, ((0, D_pad - D), (0, F_pad - F))).astype(jnp.bfloat16)
    w2p = jnp.pad(w2, ((0, F_pad - F), (0, D_pad - D))).astype(jnp.bfloat16)
    b1p = jnp.pad(b1.reshape(1, F), ((0, 0), (0, F_pad - F))).astype(jnp.float32)
    b2p = jnp.pad(b2.reshape(1, D), ((0, 0), (0, D_pad - D))).astype(jnp.float32)
    gp = jnp.pad(gamma.reshape(1, D), ((0, 0), (0, D_pad - D))).astype(jnp.float32)
    bp = jnp.pad(beta.reshape(1, D), ((0, 0), (0, D_pad - D))).astype(jnp.float32)

    # ---- VMEM budget (double-buffered streamed tiles + weight slices + scratch) ----
    vmem_est = (
        2 * tm * D_pad * 4          # x tiles (f32, double-buffered)
        + 2 * tm * D_pad * 4        # out tiles
        + 2 * D_pad * tf * 2        # W1 slice (bf16)
        + 2 * tf * D_pad * 2        # W2 slice (bf16)
        + 2 * 8 * tf * 4            # b1 slice (padded to 8 sublanes)
        + 3 * 2 * 8 * D_pad * 4     # b2, gamma, beta
        + tm * D_pad * 4            # accumulator scratch
    )
    vmem_limit = min(max(int(vmem_est * 1.5) + (2 << 20), 16 << 20), 48 << 20)

    cost = pl.CostEstimate(
        flops=int(4 * T_pad * D_pad * F_pad),          # two matmuls
        transcendentals=int(T_pad),                    # one rsqrt per row
        bytes_accessed=int(x2d.size * 4 + T_pad * D_pad * 4
                           + w1p.size * 2 + w2p.size * 2
                           + (b1p.size + b2p.size + gp.size + bp.size) * 4),
    )

    kernel = functools.partial(ffn_kernel, d_real=D, eps=eps)

    out2d = pl.pallas_call(
        kernel,
        out_shape=jax.ShapeDtypeStruct((T_pad, D_pad), x.dtype),
        grid_spec=pltpu.PrefetchScalarGridSpec(
            num_scalar_prefetch=0,
            grid=(nT, nF),                                   # reduction (F) axis last
            in_specs=[
                pl.BlockSpec((tm, D_pad), lambda i, f: (i, 0)),    # x tile
                pl.BlockSpec((D_pad, tf), lambda i, f: (0, f)),    # W1 slice
                pl.BlockSpec((1, tf),     lambda i, f: (0, f)),    # b1 slice
                pl.BlockSpec((tf, D_pad), lambda i, f: (f, 0)),    # W2 slice
                pl.BlockSpec((1, D_pad),  lambda i, f: (0, 0)),    # b2
                pl.BlockSpec((1, D_pad),  lambda i, f: (0, 0)),    # LN gamma
                pl.BlockSpec((1, D_pad),  lambda i, f: (0, 0)),    # LN beta
            ],
            out_specs=pl.BlockSpec((tm, D_pad), lambda i, f: (i, 0)),
            scratch_shapes=[pltpu.VMEM((tm, D_pad), jnp.float32)],  # Linear2 accumulator
        ),
        compiler_params=pltpu.CompilerParams(
            dimension_semantics=("parallel", "arbitrary"),
            vmem_limit_bytes=vmem_limit,
        ),
        cost_estimate=cost,
    )(x2d, w1p, b1p, w2p, b2p, gp, bp)

    return out2d[:T, :D].reshape(B, S, D)


if __name__ == "__main__":
    # Small shapes consistent with the module.
    B, S = 2, 8
    model_dim, ff_dim = 32, 64

    key = jax.random.PRNGKey(0)
    kx, k1, k2, k3, k4 = jax.random.split(key, 5)

    x = jax.random.normal(kx, (B, S, model_dim), dtype=jnp.float32)

    # nn.Linear(model_dim, ff_dim): torch weight is (ff_dim, model_dim);
    # we store the transposed (model_dim, ff_dim) for the x @ W convention.
    w1 = jax.random.normal(k1, (model_dim, ff_dim), dtype=jnp.float32) * 0.05
    b1 = jax.random.normal(k2, (ff_dim,), dtype=jnp.float32) * 0.05
    w2 = jax.random.normal(k3, (ff_dim, model_dim), dtype=jnp.float32) * 0.05
    b2 = jax.random.normal(k4, (model_dim,), dtype=jnp.float32) * 0.05

    # nn.LayerNorm default init: weight = 1, bias = 0
    gamma = jnp.ones((model_dim,), dtype=jnp.float32)
    beta = jnp.zeros((model_dim,), dtype=jnp.float32)

    out = feed_forward(x, w1, b1, w2, b2, gamma, beta)
    out = jax.block_until_ready(out)

    # Pure-JAX reference mirroring the kernel's bf16-matmul / f32-everything-else recipe.
    def ref(x):
        xb = x.astype(jnp.bfloat16)
        h = jnp.dot(xb, w1.astype(jnp.bfloat16),
                    preferred_element_type=jnp.float32) + b1
        h = jnp.maximum(h, 0.0)
        y = jnp.dot(h.astype(jnp.bfloat16), w2.astype(jnp.bfloat16),
                    preferred_element_type=jnp.float32) + b2
        z = x + y
        mean = jnp.mean(z, axis=-1, keepdims=True)
        var = jnp.mean((z - mean) ** 2, axis=-1, keepdims=True)
        return (z - mean) * jax.lax.rsqrt(var + 1e-6) * gamma + beta

    ref_out = ref(x)
    assert out.shape == (B, S, model_dim)
    assert jnp.allclose(out, ref_out, atol=2e-3, rtol=2e-3), (
        float(jnp.max(jnp.abs(out - ref_out))))

    print("KERNEL_OK")
</pallas_src>

<mosaic_0001>
module attributes {stable_mosaic.version = 11 : i64} {
  func.func @ffn_kernel(%arg0: i32, %arg1: i32, %arg2: memref<16x128xf32, #tpu.memory_space<vmem>>, %arg3: memref<128x128xbf16, #tpu.memory_space<vmem>>, %arg4: memref<1x128xf32, #tpu.memory_space<vmem>>, %arg5: memref<128x128xbf16, #tpu.memory_space<vmem>>, %arg6: memref<1x128xf32, #tpu.memory_space<vmem>>, %arg7: memref<1x128xf32, #tpu.memory_space<vmem>>, %arg8: memref<1x128xf32, #tpu.memory_space<vmem>>, %arg9: memref<16x128xf32, #tpu.memory_space<vmem>>, %arg10: memref<16x128xf32, #tpu.memory_space<vmem>>) attributes {dimension_semantics = [#tpu.dimension_semantics<parallel>, #tpu.dimension_semantics<arbitrary>], iteration_bounds = array<i64: 1, 1>, scalar_prefetch = 0 : i64, scratch_operands = 1 : i64, tpu.core_type = #tpu.core_type<tc>, window_params = [{transform_indices = @transform_0, window_bounds = array<i64: 16, 128>}, {transform_indices = @transform_1, window_bounds = array<i64: 128, 128>}, {transform_indices = @transform_2, window_bounds = array<i64: 1, 128>}, {transform_indices = @transform_3, window_bounds = array<i64: 128, 128>}, {pipeline_mode = #tpu.pipeline_mode<synchronous>, transform_indices = @transform_4, window_bounds = array<i64: 1, 128>}, {pipeline_mode = #tpu.pipeline_mode<synchronous>, transform_indices = @transform_5, window_bounds = array<i64: 1, 128>}, {pipeline_mode = #tpu.pipeline_mode<synchronous>, transform_indices = @transform_6, window_bounds = array<i64: 1, 128>}, {transform_indices = @transform_7, window_bounds = array<i64: 16, 128>}]} {
    %c0_i32 = arith.constant 0 : i32
    %0 = arith.cmpi eq, %arg1, %c0_i32 : i32
    %1 = arith.extui %0 : i1 to i32
    %c0_i32_0 = arith.constant 0 : i32
    %2 = arith.cmpi ne, %1, %c0_i32_0 : i32
    scf.if %2 {
      %cst_16 = arith.constant 0.000000e+00 : f32
      %21 = vector.broadcast %cst_16 : f32 to vector<16x128xf32>
      %c0_17 = arith.constant 0 : index
      %c0_18 = arith.constant 0 : index
      %22 = vector.load %arg10[%c0_17, %c0_18] : memref<16x128xf32, #tpu.memory_space<vmem>>, vector<16x128xf32>
      tpu.vector_store %arg10[%c0_17, %c0_18], %21 {strides = array<i32>} : memref<16x128xf32, #tpu.memory_space<vmem>>, vector<16x128xf32>,
    } else {
    }
    %c0 = arith.constant 0 : index
    %c0_1 = arith.constant 0 : index
    %3 = vector.load %arg2[%c0, %c0_1] : memref<16x128xf32, #tpu.memory_space<vmem>>, vector<16x128xf32>
    %4 = arith.truncf %3 : vector<16x128xf32> to vector<16x128xbf16>
    %c0_2 = arith.constant 0 : index
    %c0_3 = arith.constant 0 : index
    %5 = vector.load %arg3[%c0_2, %c0_3] : memref<128x128xbf16, #tpu.memory_space<vmem>>, vector<128x128xbf16>
    %cst = arith.constant dense<0.000000e+00> : vector<16x128xf32>
    %6 = tpu.matmul %4, %5, %cst {dimension_numbers = #tpu.dot_dimension_numbers<[1], [0], [0], [1], [0, 0, 1, 1], [], []>} : vector<16x128xbf16>, vector<128x128xbf16>, vector<16x128xf32> -> vector<16x128xf32>
    %c0_4 = arith.constant 0 : index
    %c0_5 = arith.constant 0 : index
    %7 = vector.load %arg4[%c0_4, %c0_5] : memref<1x128xf32, #tpu.memory_space<vmem>>, vector<1x128xf32>
    %8 = vector.broadcast %7 : vector<1x128xf32> to vector<16x128xf32>
    %9 = arith.addf %6, %8 : vector<16x128xf32>
    %cst_6 = arith.constant 0.000000e+00 : f32
    %10 = vector.broadcast %cst_6 : f32 to vector<16x128xf32>
    %11 = arith.maximumf %9, %10 : vector<16x128xf32>
    %c0_7 = arith.constant 0 : index
    %c0_8 = arith.constant 0 : index
    %12 = vector.load %arg10[%c0_7, %c0_8] : memref<16x128xf32, #tpu.memory_space<vmem>>, vector<16x128xf32>
    %13 = arith.truncf %11 : vector<16x128xf32> to vector<16x128xbf16>
    %c0_9 = arith.constant 0 : index
    %c0_10 = arith.constant 0 : index
    %14 = vector.load %arg5[%c0_9, %c0_10] : memref<128x128xbf16, #tpu.memory_space<vmem>>, vector<128x128xbf16>
    %cst_11 = arith.constant dense<0.000000e+00> : vector<16x128xf32>
    %15 = tpu.matmul %13, %14, %cst_11 {dimension_numbers = #tpu.dot_dimension_numbers<[1], [0], [0], [1], [0, 0, 1, 1], [], []>} : vector<16x128xbf16>, vector<128x128xbf16>, vector<16x128xf32> -> vector<16x128xf32>
    %16 = arith.addf %12, %15 : vector<16x128xf32>
    %c0_12 = arith.constant 0 : index
    %c0_13 = arith.constant 0 : index
    %17 = vector.load %arg10[%c0_12, %c0_13] : memref<16x128xf32, #tpu.memory_space<vmem>>, vector<16x128xf32>
    tpu.vector_store %arg10[%c0_12, %c0_13], %16 {strides = array<i32>} : memref<16x128xf32, #tpu.memory_space<vmem>>, vector<16x128xf32>,
    %c0_i32_14 = arith.constant 0 : i32
    %18 = arith.cmpi eq, %arg1, %c0_i32_14 : i32
    %19 = arith.extui %18 : i1 to i32
    %c0_i32_15 = arith.constant 0 : i32
    %20 = arith.cmpi ne, %19, %c0_i32_15 : i32
    scf.if %20 {
      %c0_16 = arith.constant 0 : index
      %c0_17 = arith.constant 0 : index
      %21 = vector.load %arg2[%c0_16, %c0_17] : memref<16x128xf32, #tpu.memory_space<vmem>>, vector<16x128xf32>
      %c0_18 = arith.constant 0 : index
      %c0_19 = arith.constant 0 : index
      %22 = vector.load %arg10[%c0_18, %c0_19] : memref<16x128xf32, #tpu.memory_space<vmem>>, vector<16x128xf32>
      %c0_20 = arith.constant 0 : index
      %c0_21 = arith.constant 0 : index
      %23 = vector.load %arg6[%c0_20, %c0_21] : memref<1x128xf32, #tpu.memory_space<vmem>>, vector<1x128xf32>
      %24 = vector.broadcast %23 : vector<1x128xf32> to vector<16x128xf32>
      %25 = arith.addf %22, %24 : vector<16x128xf32>
      %26 = arith.addf %21, %25 : vector<16x128xf32>
      %cst_22 = arith.constant dense<0.000000e+00> : vector<16xf32>
      %27 = vector.multi_reduction <add>, %26, %cst_22 [1] : vector<16x128xf32> to vector<16xf32>
      %28 = vector.shape_cast %27 : vector<16xf32> to vector<16x1xf32>
      %cst_23 = arith.constant 3.125000e-02 : f32
      %29 = vector.broadcast %cst_23 : f32 to vector<16x1xf32>
      %30 = arith.mulf %28, %29 : vector<16x1xf32>
      %31 = tpu.iota {dimensions = array<i32: 1>} : vector<16x128xi32>
      %c32_i32 = arith.constant 32 : i32
      %32 = vector.broadcast %c32_i32 : i32 to vector<16x128xi32>
      %33 = arith.cmpi slt, %31, %32 : vector<16x128xi32>
      %34 = vector.broadcast %30 : vector<16x1xf32> to vector<16x128xf32>
      %35 = arith.subf %26, %34 : vector<16x128xf32>
      %cst_24 = arith.constant 0.000000e+00 : f32
      %36 = vector.broadcast %cst_24 : f32 to vector<16x128xf32>
      %37 = arith.select %33, %35, %36 : vector<16x128xi1>, vector<16x128xf32>
      %38 = arith.mulf %37, %37 : vector<16x128xf32>
      %cst_25 = arith.constant dense<0.000000e+00> : vector<16xf32>
      %39 = vector.multi_reduction <add>, %38, %cst_25 [1] : vector<16x128xf32> to vector<16xf32>
      %40 = vector.shape_cast %39 : vector<16xf32> to vector<16x1xf32>
      %cst_26 = arith.constant 3.125000e-02 : f32
      %41 = vector.broadcast %cst_26 : f32 to vector<16x1xf32>
      %42 = arith.mulf %40, %41 : vector<16x1xf32>
      %43 = vector.broadcast %30 : vector<16x1xf32> to vector<16x128xf32>
      %44 = arith.subf %26, %43 : vector<16x128xf32>
      %cst_27 = arith.constant 9.99999997E-7 : f32
      %45 = vector.broadcast %cst_27 : f32 to vector<16x1xf32>
      %46 = arith.addf %42, %45 : vector<16x1xf32>
      %47 = math.rsqrt %46 : vector<16x1xf32>
      %48 = vector.broadcast %47 : vector<16x1xf32> to vector<16x128xf32>
      %49 = arith.mulf %44, %48 : vector<16x128xf32>
      %c0_28 = arith.constant 0 : index
      %c0_29 = arith.constant 0 : index
      %50 = vector.load %arg7[%c0_28, %c0_29] : memref<1x128xf32, #tpu.memory_space<vmem>>, vector<1x128xf32>
      %51 = vector.broadcast %50 : vector<1x128xf32> to vector<16x128xf32>
      %52 = arith.mulf %49, %51 : vector<16x128xf32>
      %c0_30 = arith.constant 0 : index
      %c0_31 = arith.constant 0 : index
      %53 = vector.load %arg8[%c0_30, %c0_31] : memref<1x128xf32, #tpu.memory_space<vmem>>, vector<1x128xf32>
      %54 = vector.broadcast %53 : vector<1x128xf32> to vector<16x128xf32>
      %55 = arith.addf %52, %54 : vector<16x128xf32>
      %c0_32 = arith.constant 0 : index
      %c0_33 = arith.constant 0 : index
      %56 = vector.load %arg9[%c0_32, %c0_33] : memref<16x128xf32, #tpu.memory_space<vmem>>, vector<16x128xf32>
      tpu.vector_store %arg9[%c0_32, %c0_33], %55 {strides = array<i32>} : memref<16x128xf32, #tpu.memory_space<vmem>>, vector<16x128xf32>,
    } else {
    }
    return
  }
  func.func @transform_0(%arg0: i32, %arg1: i32) -> (i32, i32) {
    %c0_i32 = arith.constant 0 : i32
    %c0_i32_0 = arith.constant 0 : i32
    return %arg0, %c0_i32 : i32, i32
  }
  func.func @transform_1(%arg0: i32, %arg1: i32) -> (i32, i32) {
    %c0_i32 = arith.constant 0 : i32
    %c0_i32_0 = arith.constant 0 : i32
    return %c0_i32, %arg1 : i32, i32
  }
  func.func @transform_2(%arg0: i32, %arg1: i32) -> (i32, i32) {
    %c0_i32 = arith.constant 0 : i32
    %c0_i32_0 = arith.constant 0 : i32
    return %c0_i32, %arg1 : i32, i32
  }
  func.func @transform_3(%arg0: i32, %arg1: i32) -> (i32, i32) {
    %c0_i32 = arith.constant 0 : i32
    %c0_i32_0 = arith.constant 0 : i32
    return %arg1, %c0_i32 : i32, i32
  }
  func.func @transform_4(%arg0: i32, %arg1: i32) -> (i32, i32) {
    %c0_i32 = arith.constant 0 : i32
    %c0_i32_0 = arith.constant 0 : i32
    %c0_i32_1 = arith.constant 0 : i32
    return %c0_i32, %c0_i32_0 : i32, i32
  }
  func.func @transform_5(%arg0: i32, %arg1: i32) -> (i32, i32) {
    %c0_i32 = arith.constant 0 : i32
    %c0_i32_0 = arith.constant 0 : i32
    %c0_i32_1 = arith.constant 0 : i32
    return %c0_i32, %c0_i32_0 : i32, i32
  }
  func.func @transform_6(%arg0: i32, %arg1: i32) -> (i32, i32) {
    %c0_i32 = arith.constant 0 : i32
    %c0_i32_0 = arith.constant 0 : i32
    %c0_i32_1 = arith.constant 0 : i32
    return %c0_i32, %c0_i32_0 : i32, i32
  }
  func.func @transform_7(%arg0: i32, %arg1: i32) -> (i32, i32) {
    %c0_i32 = arith.constant 0 : i32
    %c0_i32_0 = arith.constant 0 : i32
    return %arg0, %c0_i32 : i32, i32
  }
}

</mosaic_0001>

<llo_original>
// kernel: tpu_custom_call.1
$region0: #{tpu_custom_call.1}
  #allocation0 [shape = 'u32[]', space=smem, size = 0x4, offset = 0x4, fixed_abs, tag = 'smem constant byte address 0x4 - core index']
  #allocation1 [shape = 'u32[72,128]{1,0:T(1,128)}', space=vmem, size = 0x9000, scoped, tag = 'internal scratch']
  #allocation2 [shape = 'f32[16,128]{1,0:T(8,128)}', space=vmem, size = 0x2000, scoped, tag = 'scratch operand']
  %s0 = inlined_call_operand.hbm [shape: f32[16,128], index: 0, kind: input, shape index: {}]
  %s1 = inlined_call_operand.hbm [shape: bf16[128,128], index: 1, kind: input, shape index: {}]
  %s2 = inlined_call_operand.vmem [shape: f32[1,128], index: 2, kind: input, shape index: {}]
  %s3 = inlined_call_operand.hbm [shape: bf16[128,128], index: 3, kind: input, shape index: {}]
  %s4 = inlined_call_operand.vmem [shape: f32[1,128], index: 4, kind: input, shape index: {}]
  %s5 = inlined_call_operand.vmem [shape: f32[1,128], index: 5, kind: input, shape index: {}]
  %s6 = inlined_call_operand.vmem [shape: f32[1,128], index: 6, kind: input, shape index: {}]
  %s7 = inlined_call_operand.hbm [shape: f32[16,128], index: 7, kind: output, shape index: {}]
  %s8 = sld [smem:[#allocation0]]
  $region58: #{tpu_custom_call.1} parent=0
    _
  %s10 = ssub.s32 1, %s8
  %s11 = scalar_select 0, %s10, %s8
  $region1: #{tpu_custom_call.1} parent=0
    #allocation3 [shape = 'u8[8192]{0}', space=vmem, size = 0x2000, scoped, tag = 'input window, operand 0, single buffered']
    #allocation4 [shape = 's32[1]{0}', space=sflag, size = 0x4, scoped, tag = 'scoped memory for tpu_custom_call.1']
    #allocation5 [shape = 's32[1]{0}', space=sflag, size = 0x4, scoped, tag = 'scoped memory for tpu_custom_call.1']
    #allocation6 [shape = 'u8[32768]{0}', space=vmem, size = 0x8000, scoped, tag = 'input window, operand 1, single buffered']
    #allocation7 [shape = 's32[1]{0}', space=sflag, size = 0x4, scoped, tag = 'scoped memory for tpu_custom_call.1']
    #allocation8 [shape = 'u8[32768]{0}', space=vmem, size = 0x8000, scoped, tag = 'input window, operand 3, single buffered']
    #allocation9 [shape = 'u8[8192]{0}', space=vmem, size = 0x2000, scoped, tag = 'output window, operand 0, single buffered']
    %12 = vsyncpa [#allocation4], 0
    %13 = vsyncpa [#allocation7], 0
    %14 = vsyncpa [#allocation5], 0
    // Predicated region
    $region2: #{tpu_custom_call.1} parent=1 // pred_check
      _
    $region3: #{tpu_custom_call.1} parent=1 // pred_check_branch
      %16 = sbr.rel (0) target = $region5
    $region4: #{tpu_custom_call.1} parent=1 // pred_region
      %18 = vsyncadd [#allocation4], 0
      %s19 = sshll.u32 %s0, 4
      %s20 = int_to_ptr.hbm [resolvable:$true] %s19
      %s21 = sshll.u32 [#allocation3], 4
      %s22 = int_to_ptr.vmem [resolvable:$true] %s21
      %27 = dma.hbm_to_vmem [thread:$0]  %s20, 256, %s22, [#allocation4], 128, 128, 8
    $region5: #{tpu_custom_call.1} parent=1 // pred_fallthru
      _
    // Predicated region
    $region6: #{tpu_custom_call.1} parent=1 // pred_check
      _
    $region7: #{tpu_custom_call.1} parent=1 // pred_check_branch
      %29 = sbr.rel (0) target = $region9
    $region8: #{tpu_custom_call.1} parent=1 // pred_region
      %31 = vsyncadd [#allocation7], 0
      %s32 = sshll.u32 %s1, 4
      %s33 = int_to_ptr.hbm [resolvable:$true] %s32
      %s34 = sshll.u32 [#allocation6], 4
      %s35 = int_to_ptr.vmem [resolvable:$true] %s34
      %40 = dma.hbm_to_vmem [thread:$0]  %s33, 1024, %s35, [#allocation7], 64, 64, 4
    $region9: #{tpu_custom_call.1} parent=1 // pred_fallthru
      _
    // Predicated region
    $region10: #{tpu_custom_call.1} parent=1 // pred_check
      _
    $region11: #{tpu_custom_call.1} parent=1 // pred_check_branch
      %42 = sbr.rel (0) target = $region13
    $region12: #{tpu_custom_call.1} parent=1 // pred_region
      _
    $region13: #{tpu_custom_call.1} parent=1 // pred_fallthru
      _
    // Predicated region
    $region14: #{tpu_custom_call.1} parent=1 // pred_check
      _
    $region15: #{tpu_custom_call.1} parent=1 // pred_check_branch
      %44 = sbr.rel (0) target = $region17
    $region16: #{tpu_custom_call.1} parent=1 // pred_region
      %46 = vsyncadd [#allocation7], 0
      %s47 = sshll.u32 %s3, 4
      %s48 = int_to_ptr.hbm [resolvable:$true] %s47
      %s49 = sshll.u32 [#allocation8], 4
      %s50 = int_to_ptr.vmem [resolvable:$true] %s49
      %55 = dma.hbm_to_vmem [thread:$0]  %s48, 1024, %s50, [#allocation7], 64, 64, 4
    $region17: #{tpu_custom_call.1} parent=1 // pred_fallthru
      _
    // Predicated region
    $region18: #{tpu_custom_call.1} parent=1 // pred_check
      _
    $region19: #{tpu_custom_call.1} parent=1 // pred_check_branch
      %57 = sbr.rel (0) target = $region21
    $region20: #{tpu_custom_call.1} parent=1 // pred_region
      _
    $region21: #{tpu_custom_call.1} parent=1 // pred_fallthru
      _
    // Predicated region
    $region22: #{tpu_custom_call.1} parent=1 // pred_check
      _
    $region23: #{tpu_custom_call.1} parent=1 // pred_check_branch
      %59 = sbr.rel (0) target = $region25
    $region24: #{tpu_custom_call.1} parent=1 // pred_region
      _
    $region25: #{tpu_custom_call.1} parent=1 // pred_fallthru
      _
    // Predicated region
    $region26: #{tpu_custom_call.1} parent=1 // pred_check
      _
    $region27: #{tpu_custom_call.1} parent=1 // pred_check_branch
      %61 = sbr.rel (0) target = $region29
    $region28: #{tpu_custom_call.1} parent=1 // pred_region
      _
    $region29: #{tpu_custom_call.1} parent=1 // pred_fallthru
      _
    // Predicated region
    $region30: #{tpu_custom_call.1} parent=1 // pred_check
      _
    $region31: #{tpu_custom_call.1} parent=1 // pred_check_branch
      %63 = sbr.rel (0) target = $region33
    $region32: #{tpu_custom_call.1} parent=1 // pred_region
      %65 = dma.done [#allocation4], 256
    $region33: #{tpu_custom_call.1} parent=1 // pred_fallthru
      _
    // Predicated region
    $region34: #{tpu_custom_call.1} parent=1 // pred_check
      _
    $region35: #{tpu_custom_call.1} parent=1 // pred_check_branch
      %67 = sbr.rel (0) target = $region37
    $region36: #{tpu_custom_call.1} parent=1 // pred_region
      %69 = dma.done [#allocation7], 1024
    $region37: #{tpu_custom_call.1} parent=1 // pred_fallthru
      _
    // Predicated region
    $region38: #{tpu_custom_call.1} parent=1 // pred_check
      _
    $region39: #{tpu_custom_call.1} parent=1 // pred_check_branch
      %71 = sbr.rel (0) target = $region41
    $region40: #{tpu_custom_call.1} parent=1 // pred_region
      %73 = dma.done [#allocation7], 1024
    $region41: #{tpu_custom_call.1} parent=1 // pred_fallthru
      _
    %p74 = scmp.eq.s32.totalorder 0, 0
    // Predicated region
    $region42: #{tpu_custom_call.1} parent=1 // pred_check
      %p75 = pneg %p74
    $region43: #{tpu_custom_call.1} parent=1 // pred_check_branch
      %77 = sbr.rel (%p75) target = $region45
    $region44: #{tpu_custom_call.1} parent=1 // pred_region
      %78 = vst [vmem:[#allocation2] sm:$0xff] 0.0
      %79 = vst [vmem:[#allocation2 + $0x8] sm:$0xff] 0.0
    $region45: #{tpu_custom_call.1} parent=1 // pred_fallthru
      _
    %v80 = vld [vmem:[#allocation3] sm:$0xff]
    %v81 = vld [vmem:[#allocation3 + $0x8] sm:$0xff]
    %v82 = vpack.c.bf16 %v81, %v80
    %v83 = vld [vmem:[#allocation6] sm:$0xf]
    %v84 = vld [vmem:[#allocation6 + $0x4] sm:$0xf]
    %v85 = vld [vmem:[#allocation6 + $0x8] sm:$0xf]
    %v86 = vld [vmem:[#allocation6 + $0xc] sm:$0xf]
    %v87 = vld [vmem:[#allocation6 + $0x10] sm:$0xf]
    %v88 = vld [vmem:[#allocation6 + $0x14] sm:$0xf]
    %v89 = vld [vmem:[#allocation6 + $0x18] sm:$0xf]
    %v90 = vld [vmem:[#allocation6 + $0x1c] sm:$0xf]
    %v91 = vld [vmem:[#allocation6 + $0x20] sm:$0xf]
    %v92 = vld [vmem:[#allocation6 + $0x24] sm:$0xf]
    %v93 = vld [vmem:[#allocation6 + $0x28] sm:$0xf]
    %v94 = vld [vmem:[#allocation6 + $0x2c] sm:$0xf]
    %v95 = vld [vmem:[#allocation6 + $0x30] sm:$0xf]
    %v96 = vld [vmem:[#allocation6 + $0x34] sm:$0xf]
    %v97 = vld [vmem:[#allocation6 + $0x38] sm:$0xf]
    %v98 = vld [vmem:[#allocation6 + $0x3c] sm:$0xf]
    %v99 = vld [vmem:[%s2] sm:$0x1]
    %v101 = vperm.slane %v99, 0
    %v119 = vunpack.c.l.b16 %v83
    %v120 = vunpack.c.l.b16 %v84
    %v121 = vunpack.c.l.b16 %v85
    %v122 = vunpack.c.l.b16 %v86
    %v123 = vunpack.c.l.b16 %v87
    %v124 = vunpack.c.l.b16 %v88
    %v125 = vunpack.c.l.b16 %v89
    %v126 = vunpack.c.l.b16 %v90
    %v127 = vunpack.c.l.b16 %v91
    %v128 = vunpack.c.l.b16 %v92
    %v129 = vunpack.c.l.b16 %v93
    %v130 = vunpack.c.l.b16 %v94
    %v131 = vunpack.c.l.b16 %v95
    %v132 = vunpack.c.l.b16 %v96
    %v133 = vunpack.c.l.b16 %v97
    %v134 = vunpack.c.l.b16 %v98
    %v135 = vpack.c.b16 %v120, %v119
    %v136 = vpack.c.b16 %v122, %v121
    %v137 = vpack.c.b16 %v124, %v123
    %v138 = vpack.c.b16 %v126, %v125
    %v139 = vpack.c.b16 %v128, %v127
    %v140 = vpack.c.b16 %v130, %v129
    %v141 = vpack.c.b16 %v132, %v131
    %v142 = vpack.c.b16 %v134, %v133
    %151 = vmatpush.bf16.msra.mxu0 %v142
    %152 = vmatpush.bf16.msra.mxu0 %v141
    %153 = vmatpush.bf16.msra.mxu0 %v140
    %154 = vmatpush.bf16.msra.mxu0 %v139
    %155 = vmatpush.bf16.msra.mxu0 %v138
    %156 = vmatpush.bf16.msra.mxu0 %v137
    %157 = vmatpush.bf16.msra.mxu0 %v136
    %158 = vmatpush.bf16.msra.mxu0 %v135
    %159 = vmatmul.bf16.gmra.mxu0 %v82
    %v160 = vpop.f32.mrf.mxu0
    %v161 = vadd.f32 %v101, %v160
    %v162 = vpop.f32.mrf.mxu0
    %v163 = vadd.f32 %v101, %v162
    %164 = vdwg.mxu0
    %v165 = vmax.f32 %v161, 0.0
    %v166 = vmax.f32 %v163, 0.0
    %v167 = vld [vmem:[#allocation2] sm:$0xff]
    %v168 = vld [vmem:[#allocation2 + $0x8] sm:$0xff]
    %v169 = vpack.c.bf16 %v166, %v165
    %v170 = vld [vmem:[#allocation8] sm:$0xf]
    %v171 = vld [vmem:[#allocation8 + $0x4] sm:$0xf]
    %v172 = vld [vmem:[#allocation8 + $0x8] sm:$0xf]
    %v173 = vld [vmem:[#allocation8 + $0xc] sm:$0xf]
    %v174 = vld [vmem:[#allocation8 + $0x10] sm:$0xf]
    %v175 = vld [vmem:[#allocation8 + $0x14] sm:$0xf]
    %v176 = vld [vmem:[#allocation8 + $0x18] sm:$0xf]
    %v177 = vld [vmem:[#allocation8 + $0x1c] sm:$0xf]
    %v178 = vld [vmem:[#allocation8 + $0x20] sm:$0xf]
    %v179 = vld [vmem:[#allocation8 + $0x24] sm:$0xf]
    %v180 = vld [vmem:[#allocation8 + $0x28] sm:$0xf]
    %v181 = vld [vmem:[#allocation8 + $0x2c] sm:$0xf]
    %v182 = vld [vmem:[#allocation8 + $0x30] sm:$0xf]
    %v183 = vld [vmem:[#allocation8 + $0x34] sm:$0xf]
    %v184 = vld [vmem:[#allocation8 + $0x38] sm:$0xf]
    %v185 = vld [vmem:[#allocation8 + $0x3c] sm:$0xf]
    %v202 = vunpack.c.l.b16 %v170
    %v203 = vunpack.c.l.b16 %v171
    %v204 = vunpack.c.l.b16 %v172
    %v205 = vunpack.c.l.b16 %v173
    %v206 = vunpack.c.l.b16 %v174
    %v207 = vunpack.c.l.b16 %v175
    %v208 = vunpack.c.l.b16 %v176
    %v209 = vunpack.c.l.b16 %v177
    %v210 = vunpack.c.l.b16 %v178
    %v211 = vunpack.c.l.b16 %v179
    %v212 = vunpack.c.l.b16 %v180
    %v213 = vunpack.c.l.b16 %v181
    %v214 = vunpack.c.l.b16 %v182
    %v215 = vunpack.c.l.b16 %v183
    %v216 = vunpack.c.l.b16 %v184
    %v217 = vunpack.c.l.b16 %v185
    %v218 = vpack.c.b16 %v203, %v202
    %v219 = vpack.c.b16 %v205, %v204
    %v220 = vpack.c.b16 %v207, %v206
    %v221 = vpack.c.b16 %v209, %v208
    %v222 = vpack.c.b16 %v211, %v210
    %v223 = vpack.c.b16 %v213, %v212
    %v224 = vpack.c.b16 %v215, %v214
    %v225 = vpack.c.b16 %v217, %v216
    %234 = vmatpush.bf16.msra.mxu0 %v225
    %235 = vmatpush.bf16.msra.mxu0 %v224
    %236 = vmatpush.bf16.msra.mxu0 %v223
    %237 = vmatpush.bf16.msra.mxu0 %v222
    %238 = vmatpush.bf16.msra.mxu0 %v221
    %239 = vmatpush.bf16.msra.mxu0 %v220
    %240 = vmatpush.bf16.msra.mxu0 %v219
    %241 = vmatpush.bf16.msra.mxu0 %v218
    %242 = vmatmul.bf16.gmra.mxu0 %v169
    %v243 = vpop.f32.mrf.mxu0
    %v244 = vadd.f32 0.0, %v243
    %v245 = vpop.f32.mrf.mxu0
    %v246 = vadd.f32 0.0, %v245
    %247 = vdwg.mxu0
    %v248 = vadd.f32 %v167, %v244
    %v249 = vadd.f32 %v168, %v246
    %250 = vst [vmem:[#allocation2] sm:$0xff] %v248
    %251 = vst [vmem:[#allocation2 + $0x8] sm:$0xff] %v249
    // Predicated region
    $region46: #{tpu_custom_call.1} parent=1 // pred_check
      %p252 = pneg %p74
    $region47: #{tpu_custom_call.1} parent=1 // pred_check_branch
      %254 = sbr.rel (%p252) target = $region49
    $region48: #{tpu_custom_call.1} parent=1 // pred_region
      %v255 = vld [vmem:[#allocation3] sm:$0xff]
      %v256 = vld [vmem:[#allocation3 + $0x8] sm:$0xff]
      %v257 = vld [vmem:[#allocation2] sm:$0xff]
      %v258 = vld [vmem:[#allocation2 + $0x8] sm:$0xff]
      %v259 = vld [vmem:[%s4] sm:$0x1]
      %v261 = vperm.slane %v259, 0
      %v263 = vadd.f32 %v257, %v261
      %v264 = vadd.f32 %v258, %v261
      %v265 = vadd.f32 %v255, %v263
      %v266 = vadd.f32 %v256, %v264
      %267 = vadd.xlane.f32.xlu0 %v265
      %v268 = vpop.xlane.xlu0 %267
      %269 = vadd.xlane.f32.xlu0 %v266
      %v270 = vpop.xlane.xlu0 %269
      %v271 = vmul.f32 %v268, 0.03125
      %v272 = vmul.f32 %v270, 0.03125
      %v273 = vlaneseq
      %v274 = vand.u32 %v273, 127
      %vm275 = vcmp.lt.s32.totalorder %v274, 32
      %v276 = vsub.f32 %v265, %v271
      %v277 = vsub.f32 %v266, %v272
      %v278 = vsel %vm275, %v276, 0.0
      %v279 = vsel %vm275, %v277, 0.0
      %v280 = vmul.f32 %v278, %v278
      %v281 = vmul.f32 %v279, %v279
      %282 = vadd.xlane.f32.xlu0 %v280
      %v283 = vpop.xlane.xlu0 %282
      %284 = vadd.xlane.f32.xlu0 %v281
      %v285 = vpop.xlane.xlu0 %284
      %v286 = vmul.f32 %v283, 0.03125
      %v287 = vmul.f32 %v285, 0.03125
      %v288 = vadd.f32 %v286, 1e-06
      %v289 = vadd.f32 %v287, 1e-06
      %v290 = vrsqrt.pop %v288
      %v291 = vmul.f32 %v290, %v288
      %v292 = vmul.f32 %v291, %v290
      %v293 = vmul.f32 0.5, %v292
      %v294 = vsub.f32 1.5, %v293
      %v295 = vmul.f32 %v290, %v294
      %vm296 = vweird.f32 %v288
      %vm297 = vweird.f32 %v290
      %vm298 = vmor %vm296, %vm297
      %v299 = vsel %vm298, %v290, %v295
      %v300 = vrsqrt.pop %v289
      %v301 = vmul.f32 %v300, %v289
      %v302 = vmul.f32 %v301, %v300
      %v303 = vmul.f32 0.5, %v302
      %v304 = vsub.f32 1.5, %v303
      %v305 = vmul.f32 %v300, %v304
      %vm306 = vweird.f32 %v289
      %vm307 = vweird.f32 %v300
      %vm308 = vmor %vm306, %vm307
      %v309 = vsel %vm308, %v300, %v305
      %v310 = vmul.f32 %v276, %v299
      %v311 = vmul.f32 %v277, %v309
      %v312 = vld [vmem:[%s5] sm:$0x1]
      %v314 = vperm.slane %v312, 0
      %v316 = vmul.f32 %v310, %v314
      %v317 = vmul.f32 %v311, %v314
      %v318 = vld [vmem:[%s6] sm:$0x1]
      %v320 = vperm.slane %v318, 0
      %v322 = vadd.f32 %v316, %v320
      %v323 = vadd.f32 %v317, %v320
      %324 = vst [vmem:[#allocation9] sm:$0xff] %v322
      %325 = vst [vmem:[#allocation9 + $0x8] sm:$0xff] %v323
    $region49: #{tpu_custom_call.1} parent=1 // pred_fallthru
      _
    // Predicated region
    $region50: #{tpu_custom_call.1} parent=1 // pred_check
      _
    $region51: #{tpu_custom_call.1} parent=1 // pred_check_branch
      %327 = sbr.rel (0) target = $region53
    $region52: #{tpu_custom_call.1} parent=1 // pred_region
      %329 = vsyncadd [#allocation5], 0
      %s330 = sshll.u32 [#allocation9], 4
      %s331 = int_to_ptr.vmem [resolvable:$true] %s330
      %s332 = sshll.u32 %s7, 4
      %s333 = int_to_ptr.hbm [resolvable:$true] %s332
      %338 = dma.vmem_to_hbm [thread:$0]  %s331, 256, %s333, [#allocation5], 128, 128, 8
    $region53: #{tpu_custom_call.1} parent=1 // pred_fallthru
      _
    // Predicated region
    $region54: #{tpu_custom_call.1} parent=1 // pred_check
      _
    $region55: #{tpu_custom_call.1} parent=1 // pred_check_branch
      %340 = sbr.rel (0) target = $region57
    $region56: #{tpu_custom_call.1} parent=1 // pred_region
      %342 = dma.done [#allocation5], 256
    $region57: #{tpu_custom_call.1} parent=1 // pred_fallthru
      _
    %343 = vsyncpa [#allocation4], 1
    %344 = vsyncpa [#allocation7], 1
    %345 = vsyncpa [#allocation5], 1

</llo_original>
